<compile_context>
chip_gen: v5e
topology: v5e:2x2
jax: 0.10.0
libtpu: 0.0.40
codegen_flags: <defaults>
</compile_context>

<pallas_src>
import functools

import jax
import jax.numpy as jnp
from jax.experimental import pallas as pl
from jax.experimental.pallas import tpu as pltpu


def _round_up(x, m):
    return ((x + m - 1) // m) * m


# Keep every layer VMEM-resident only below this total padded-weight size;
# above it fall back to per-layer pallas_calls (v7x: 64 MiB physical VMEM).
_RESIDENT_WEIGHT_LIMIT = 24 * 1024 * 1024


def _choose_tm(m, widest_lanes):
    """Rows per grid step.

    * tiny batches: one block (block dim == full array dim is always legal)
    * otherwise: bounded tile (256/512 rows, multiple of 8), at least 2 grid
      steps so the 'parallel' M axis can shard across both v7x TensorCores,
      and never a full-M block (bounds per-step VMEM, keeps pipeline running).
    """
    if m <= 8:
        return m
    cap = 512 if widest_lanes <= 128 else 256   # keep f32 working tile modest (v5e vregs)
    half = _round_up(pl.cdiv(m, 2), 8)
    return max(8, min(cap, half))


def _mlp_kernel(x_ref, *refs, acts):
    """Fused multi-layer MLP.

    refs = (w0_t, b0, w1_t, b1, ..., o_ref)
      wN_t: (K_pad, N_pad) pre-transposed, zero-padded, bf16, VMEM-resident
      bN:   (1, N_pad)     zero-padded, bf16
      o_ref:(TM, N_last_pad)
    The running activation h stays on-chip in f32; the MXU is fed bf16.
    """
    o_ref = refs[-1]
    params = refs[:-1]
    h = x_ref[...].astype(jnp.float32)
    for li, apply_act in enumerate(acts):
        w = params[2 * li][...]
        b = params[2 * li + 1][...].astype(jnp.float32)
        h = jnp.dot(h.astype(w.dtype), w, preferred_element_type=jnp.float32) + b
        if apply_act:
            h = jnp.maximum(h, 0.0)
    o_ref[...] = h.astype(o_ref.dtype)


def _mlp_pallas(x_pad, layers, acts, out_dtype, single_buffer):
    """One fused pallas_call over the given (already padded) layers."""
    M, k0p = x_pad.shape
    n_last = layers[-1][0].shape[1]
    widest = max([k0p] + [w.shape[1] for w, _ in layers])
    TM = _choose_tm(M, widest)
    grid = (pl.cdiv(M, TM),)

    # Constant (grid-invariant) inputs: single-buffer to halve their VMEM use.
    w_kwargs = {"pipeline_mode": pl.Buffered(1)} if single_buffer else {}

    in_specs = [pl.BlockSpec((TM, k0p), lambda i: (i, 0))]
    flat = [x_pad]
    flops = 0
    weight_bytes = 0
    for w, b in layers:
        K, N = w.shape
        flat += [w, b]
        in_specs.append(pl.BlockSpec((K, N), lambda i: (0, 0), **w_kwargs))
        in_specs.append(pl.BlockSpec((1, N), lambda i: (0, 0), **w_kwargs))
        flops += 2 * M * K * N
        weight_bytes += K * N * w.dtype.itemsize + N * b.dtype.itemsize

    out_itemsize = jnp.dtype(out_dtype).itemsize
    x_itemsize = x_pad.dtype.itemsize

    # VMEM footprint estimate -> explicit limit (headroom on v7x's 64 MiB).
    bufs = 1 if single_buffer else 2
    vmem_est = 2 * TM * k0p * x_itemsize + 2 * TM * n_last * out_itemsize
    for w, b in layers:
        K, N = w.shape
        vmem_est += bufs * (K * N * w.dtype.itemsize + 8 * N * b.dtype.itemsize)
    vmem_est += 2 * TM * widest * 4           # f32 intermediate activation headroom
    vmem_limit = int(min(64 * 2**20, max(32 * 2**20, 2 * vmem_est)))

    cost = pl.CostEstimate(
        flops=flops,
        transcendentals=0,
        # Weights are read once (VMEM-resident across the grid); x/out once per row.
        bytes_accessed=M * k0p * x_itemsize + weight_bytes + M * n_last * out_itemsize,
    )

    kernel = functools.partial(_mlp_kernel, acts=tuple(acts))
    return pl.pallas_call(
        kernel,
        out_shape=jax.ShapeDtypeStruct((M, n_last), out_dtype),
        grid_spec=pltpu.PrefetchScalarGridSpec(
            num_scalar_prefetch=0,
            grid=grid,
            in_specs=in_specs,
            out_specs=pl.BlockSpec((TM, n_last), lambda i: (i, 0)),
        ),
        compiler_params=pltpu.CompilerParams(
            dimension_semantics=("parallel",),
            vmem_limit_bytes=vmem_limit,
        ),
        cost_estimate=cost,
    )(*flat)


class MLP:
    """JAX/Pallas port of SAINT's MLP. act='relu' or None."""

    def __init__(self, dims, act=None, key=None, param_dtype=jnp.bfloat16):
        if key is None:
            key = jax.random.PRNGKey(0)
        self.in_dim = dims[0]
        self.out_dim = dims[-1]
        self.k0_pad = _round_up(dims[0], 128)
        self.param_dtype = jnp.dtype(param_dtype)
        self.raw_layers = []   # (w (N,K) torch layout f32, b (N,) f32, apply_act)
        self.params = []       # (w_t (K_pad,N_pad) bf16, b (1,N_pad) bf16, apply_act)
        self._single_buffer_ok = None

        k_in_pad = self.k0_pad
        for ind, (dim_in, dim_out) in enumerate(zip(dims[:-1], dims[1:])):
            key, kw, kb = jax.random.split(key, 3)
            bound = 1.0 / float(dim_in) ** 0.5      # nn.Linear default init
            w = jax.random.uniform(kw, (dim_out, dim_in), jnp.float32,
                                   minval=-bound, maxval=bound)
            b = jax.random.uniform(kb, (dim_out,), jnp.float32,
                                   minval=-bound, maxval=bound)
            is_last = ind >= len(dims) - 1          # reproduces original SAINT bug: never True
            apply_act = (act is not None) and (not is_last)
            self.raw_layers.append((w, b, apply_act))

            # Pre-transpose + zero-pad + bf16-cast ONCE at init (lane-dense K and N).
            n_pad = _round_up(dim_out, 128)
            w_t = jnp.pad(jnp.transpose(w),
                          ((0, k_in_pad - dim_in), (0, n_pad - dim_out)))
            b_p = jnp.pad(b, (0, n_pad - dim_out)).reshape(1, n_pad)
            self.params.append((w_t.astype(self.param_dtype),
                                b_p.astype(self.param_dtype), apply_act))
            k_in_pad = n_pad

        self.n_out_pad = self.params[-1][0].shape[1]

    def _run(self, x_pad, layers, acts, out_dtype):
        if self._single_buffer_ok is not False:
            try:
                out = _mlp_pallas(x_pad, layers, acts, out_dtype, single_buffer=True)
                self._single_buffer_ok = True
                return out
            except Exception:
                # pl.Buffered(1) not supported by this build: use default buffering.
                self._single_buffer_ok = False
        return _mlp_pallas(x_pad, layers, acts, out_dtype, single_buffer=False)

    def __call__(self, x):
        M, K0 = x.shape
        assert K0 == self.in_dim
        # Lane-dense x: pad feature dim to 128 once (zero cols are inert).
        x_pad = x if K0 == self.k0_pad else jnp.pad(x, ((0, 0), (0, self.k0_pad - K0)))

        layers = [(w, b) for w, b, _ in self.params]
        acts = [a for _, _, a in self.params]
        resident = sum(w.size * w.dtype.itemsize + b.size * b.dtype.itemsize
                       for w, b in layers)
        if resident <= _RESIDENT_WEIGHT_LIMIT:
            out = self._run(x_pad, layers, acts, x.dtype)          # fully fused path
        else:
            # Too large to keep all layers VMEM-resident: one fused call per layer,
            # padded f32 activations between calls.
            h = x_pad
            for li, (layer, a) in enumerate(zip(layers, acts)):
                last = li == len(layers) - 1
                h = self._run(h, [layer], [a], x.dtype if last else jnp.float32)
            out = h
        return out[:, :self.out_dim]       # drop lane padding (wrapper-side slice)


def _reference_matched(mlp, x):
    """Pure-JAX reference matching the kernel's numerics (bf16 matmul, f32 epilogue)."""
    h = x.astype(jnp.float32)
    for w, b, apply_act in mlp.raw_layers:
        h = jnp.dot(h.astype(mlp.param_dtype), w.T.astype(mlp.param_dtype),
                    preferred_element_type=jnp.float32)
        h = h + b.astype(mlp.param_dtype).astype(jnp.float32)
        if apply_act:
            h = jnp.maximum(h, 0.0)
    return h


def _reference_f32(mlp, x):
    """Pure-f32 reference (PyTorch-faithful math, before bf16 weight cast)."""
    h = x
    for w, b, apply_act in mlp.raw_layers:
        h = h @ w.T + b
        if apply_act:
            h = jnp.maximum(h, 0.0)
    return h


if __name__ == "__main__":
    key = jax.random.PRNGKey(0)
    k_x, k_p = jax.random.split(key)

    dims = [32, 64, 48]          # SAINT-style small MLP: in=32, hidden=64, out=48
    batch = 8
    x = jax.random.normal(k_x, (batch, dims[0]), jnp.float32)

    mlp = MLP(dims, act="relu", key=k_p)
    out = jax.block_until_ready(mlp(x))

    assert out.shape == (batch, dims[-1])
    ref = _reference_matched(mlp, x)
    assert jnp.allclose(out, ref, atol=2e-3, rtol=2e-3), \
        float(jnp.max(jnp.abs(out - ref)))
    ref32 = _reference_f32(mlp, x)
    assert jnp.allclose(out, ref32, atol=1e-1, rtol=1e-1)

    print("KERNEL_OK")
</pallas_src>

<mosaic_0001>
module attributes {stable_mosaic.version = 11 : i64} {
  func.func @_mlp_kernel(%arg0: i32, %arg1: memref<8x128xf32, #tpu.memory_space<vmem>>, %arg2: memref<128x128xbf16, #tpu.memory_space<vmem>>, %arg3: memref<1x128xbf16, #tpu.memory_space<vmem>>, %arg4: memref<128x128xbf16, #tpu.memory_space<vmem>>, %arg5: memref<1x128xbf16, #tpu.memory_space<vmem>>, %arg6: memref<8x128xf32, #tpu.memory_space<vmem>>) attributes {dimension_semantics = [#tpu.dimension_semantics<parallel>], iteration_bounds = array<i64: 1>, scalar_prefetch = 0 : i64, scratch_operands = 0 : i64, tpu.core_type = #tpu.core_type<tc>, window_params = [{transform_indices = @transform_0, window_bounds = array<i64: 8, 128>}, {pipeline_mode = #tpu.pipeline_mode<synchronous>, transform_indices = @transform_1, window_bounds = array<i64: 128, 128>}, {pipeline_mode = #tpu.pipeline_mode<synchronous>, transform_indices = @transform_2, window_bounds = array<i64: 1, 128>}, {pipeline_mode = #tpu.pipeline_mode<synchronous>, transform_indices = @transform_3, window_bounds = array<i64: 128, 128>}, {pipeline_mode = #tpu.pipeline_mode<synchronous>, transform_indices = @transform_4, window_bounds = array<i64: 1, 128>}, {transform_indices = @transform_5, window_bounds = array<i64: 8, 128>}]} {
    %c0 = arith.constant 0 : index
    %c0_0 = arith.constant 0 : index
    %0 = vector.load %arg1[%c0, %c0_0] : memref<8x128xf32, #tpu.memory_space<vmem>>, vector<8x128xf32>
    %c0_1 = arith.constant 0 : index
    %c0_2 = arith.constant 0 : index
    %1 = vector.load %arg2[%c0_1, %c0_2] : memref<128x128xbf16, #tpu.memory_space<vmem>>, vector<128x128xbf16>
    %c0_3 = arith.constant 0 : index
    %c0_4 = arith.constant 0 : index
    %2 = vector.load %arg3[%c0_3, %c0_4] : memref<1x128xbf16, #tpu.memory_space<vmem>>, vector<1x128xbf16>
    %3 = arith.extf %2 : vector<1x128xbf16> to vector<1x128xf32>
    %4 = arith.truncf %0 : vector<8x128xf32> to vector<8x128xbf16>
    %cst = arith.constant dense<0.000000e+00> : vector<8x128xf32>
    %5 = tpu.matmul %4, %1, %cst {dimension_numbers = #tpu.dot_dimension_numbers<[1], [0], [0], [1], [0, 0, 1, 1], [], []>} : vector<8x128xbf16>, vector<128x128xbf16>, vector<8x128xf32> -> vector<8x128xf32>
    %6 = vector.broadcast %3 : vector<1x128xf32> to vector<8x128xf32>
    %7 = arith.addf %5, %6 : vector<8x128xf32>
    %cst_5 = arith.constant 0.000000e+00 : f32
    %8 = vector.broadcast %cst_5 : f32 to vector<8x128xf32>
    %9 = arith.maximumf %7, %8 : vector<8x128xf32>
    %c0_6 = arith.constant 0 : index
    %c0_7 = arith.constant 0 : index
    %10 = vector.load %arg4[%c0_6, %c0_7] : memref<128x128xbf16, #tpu.memory_space<vmem>>, vector<128x128xbf16>
    %c0_8 = arith.constant 0 : index
    %c0_9 = arith.constant 0 : index
    %11 = vector.load %arg5[%c0_8, %c0_9] : memref<1x128xbf16, #tpu.memory_space<vmem>>, vector<1x128xbf16>
    %12 = arith.extf %11 : vector<1x128xbf16> to vector<1x128xf32>
    %13 = arith.truncf %9 : vector<8x128xf32> to vector<8x128xbf16>
    %cst_10 = arith.constant dense<0.000000e+00> : vector<8x128xf32>
    %14 = tpu.matmul %13, %10, %cst_10 {dimension_numbers = #tpu.dot_dimension_numbers<[1], [0], [0], [1], [0, 0, 1, 1], [], []>} : vector<8x128xbf16>, vector<128x128xbf16>, vector<8x128xf32> -> vector<8x128xf32>
    %15 = vector.broadcast %12 : vector<1x128xf32> to vector<8x128xf32>
    %16 = arith.addf %14, %15 : vector<8x128xf32>
    %cst_11 = arith.constant 0.000000e+00 : f32
    %17 = vector.broadcast %cst_11 : f32 to vector<8x128xf32>
    %18 = arith.maximumf %16, %17 : vector<8x128xf32>
    %c0_12 = arith.constant 0 : index
    %c0_13 = arith.constant 0 : index
    %19 = vector.load %arg6[%c0_12, %c0_13] : memref<8x128xf32, #tpu.memory_space<vmem>>, vector<8x128xf32>
    tpu.vector_store %arg6[%c0_12, %c0_13], %18 {strides = array<i32>} : memref<8x128xf32, #tpu.memory_space<vmem>>, vector<8x128xf32>,
    return
  }
  func.func @transform_0(%arg0: i32) -> (i32, i32) {
    %c0_i32 = arith.constant 0 : i32
    %c0_i32_0 = arith.constant 0 : i32
    return %arg0, %c0_i32 : i32, i32
  }
  func.func @transform_1(%arg0: i32) -> (i32, i32) {
    %c0_i32 = arith.constant 0 : i32
    %c0_i32_0 = arith.constant 0 : i32
    %c0_i32_1 = arith.constant 0 : i32
    return %c0_i32, %c0_i32_0 : i32, i32
  }
  func.func @transform_2(%arg0: i32) -> (i32, i32) {
    %c0_i32 = arith.constant 0 : i32
    %c0_i32_0 = arith.constant 0 : i32
    %c0_i32_1 = arith.constant 0 : i32
    return %c0_i32, %c0_i32_0 : i32, i32
  }
  func.func @transform_3(%arg0: i32) -> (i32, i32) {
    %c0_i32 = arith.constant 0 : i32
    %c0_i32_0 = arith.constant 0 : i32
    %c0_i32_1 = arith.constant 0 : i32
    return %c0_i32, %c0_i32_0 : i32, i32
  }
  func.func @transform_4(%arg0: i32) -> (i32, i32) {
    %c0_i32 = arith.constant 0 : i32
    %c0_i32_0 = arith.constant 0 : i32
    %c0_i32_1 = arith.constant 0 : i32
    return %c0_i32, %c0_i32_0 : i32, i32
  }
  func.func @transform_5(%arg0: i32) -> (i32, i32) {
    %c0_i32 = arith.constant 0 : i32
    %c0_i32_0 = arith.constant 0 : i32
    return %arg0, %c0_i32 : i32, i32
  }
}

module attributes {stable_mosaic.version = 11 : i64} {
  func.func @_mlp_kernel(%arg0: i32, %arg1: memref<8x128xf32, #tpu.memory_space<vmem>>, %arg2: memref<128x128xbf16, #tpu.memory_space<vmem>>, %arg3: memref<1x128xbf16, #tpu.memory_space<vmem>>, %arg4: memref<128x128xbf16, #tpu.memory_space<vmem>>, %arg5: memref<1x128xbf16, #tpu.memory_space<vmem>>, %arg6: memref<8x128xf32, #tpu.memory_space<vmem>>) attributes {dimension_semantics = [#tpu.dimension_semantics<parallel>], iteration_bounds = array<i64: 1>, scalar_prefetch = 0 : i64, scratch_operands = 0 : i64, tpu.core_type = #tpu.core_type<tc>, window_params = [{transform_indices = @transform_0, window_bounds = array<i64: 8, 128>}, {pipeline_mode = #tpu.pipeline_mode<synchronous>, transform_indices = @transform_1, window_bounds = array<i64: 128, 128>}, {pipeline_mode = #tpu.pipeline_mode<synchronous>, transform_indices = @transform_2, window_bounds = array<i64: 1, 128>}, {pipeline_mode = #tpu.pipeline_mode<synchronous>, transform_indices = @transform_3, window_bounds = array<i64: 128, 128>}, {pipeline_mode = #tpu.pipeline_mode<synchronous>, transform_indices = @transform_4, window_bounds = array<i64: 1, 128>}, {transform_indices = @transform_5, window_bounds = array<i64: 8, 128>}]} {
    %c0 = arith.constant 0 : index
    %c0_0 = arith.constant 0 : index
    %0 = vector.load %arg1[%c0, %c0_0] : memref<8x128xf32, #tpu.memory_space<vmem>>, vector<8x128xf32>
    %c0_1 = arith.constant 0 : index
    %c0_2 = arith.constant 0 : index
    %1 = vector.load %arg2[%c0_1, %c0_2] : memref<128x128xbf16, #tpu.memory_space<vmem>>, vector<128x128xbf16>
    %c0_3 = arith.constant 0 : index
    %c0_4 = arith.constant 0 : index
    %2 = vector.load %arg3[%c0_3, %c0_4] : memref<1x128xbf16, #tpu.memory_space<vmem>>, vector<1x128xbf16>
    %3 = arith.extf %2 : vector<1x128xbf16> to vector<1x128xf32>
    %4 = arith.truncf %0 : vector<8x128xf32> to vector<8x128xbf16>
    %cst = arith.constant dense<0.000000e+00> : vector<8x128xf32>
    %5 = tpu.matmul %4, %1, %cst {dimension_numbers = #tpu.dot_dimension_numbers<[1], [0], [0], [1], [0, 0, 1, 1], [], []>} : vector<8x128xbf16>, vector<128x128xbf16>, vector<8x128xf32> -> vector<8x128xf32>
    %6 = vector.broadcast %3 : vector<1x128xf32> to vector<8x128xf32>
    %7 = arith.addf %5, %6 : vector<8x128xf32>
    %cst_5 = arith.constant 0.000000e+00 : f32
    %8 = vector.broadcast %cst_5 : f32 to vector<8x128xf32>
    %9 = arith.maximumf %7, %8 : vector<8x128xf32>
    %c0_6 = arith.constant 0 : index
    %c0_7 = arith.constant 0 : index
    %10 = vector.load %arg4[%c0_6, %c0_7] : memref<128x128xbf16, #tpu.memory_space<vmem>>, vector<128x128xbf16>
    %c0_8 = arith.constant 0 : index
    %c0_9 = arith.constant 0 : index
    %11 = vector.load %arg5[%c0_8, %c0_9] : memref<1x128xbf16, #tpu.memory_space<vmem>>, vector<1x128xbf16>
    %12 = arith.extf %11 : vector<1x128xbf16> to vector<1x128xf32>
    %13 = arith.truncf %9 : vector<8x128xf32> to vector<8x128xbf16>
    %cst_10 = arith.constant dense<0.000000e+00> : vector<8x128xf32>
    %14 = tpu.matmul %13, %10, %cst_10 {dimension_numbers = #tpu.dot_dimension_numbers<[1], [0], [0], [1], [0, 0, 1, 1], [], []>} : vector<8x128xbf16>, vector<128x128xbf16>, vector<8x128xf32> -> vector<8x128xf32>
    %15 = vector.broadcast %12 : vector<1x128xf32> to vector<8x128xf32>
    %16 = arith.addf %14, %15 : vector<8x128xf32>
    %cst_11 = arith.constant 0.000000e+00 : f32
    %17 = vector.broadcast %cst_11 : f32 to vector<8x128xf32>
    %18 = arith.maximumf %16, %17 : vector<8x128xf32>
    %c0_12 = arith.constant 0 : index
    %c0_13 = arith.constant 0 : index
    %19 = vector.load %arg6[%c0_12, %c0_13] : memref<8x128xf32, #tpu.memory_space<vmem>>, vector<8x128xf32>
    tpu.vector_store %arg6[%c0_12, %c0_13], %18 {strides = array<i32>} : memref<8x128xf32, #tpu.memory_space<vmem>>, vector<8x128xf32>,
    return
  }
  func.func @transform_0(%arg0: i32) -> (i32, i32) {
    %c0_i32 = arith.constant 0 : i32
    %c0_i32_0 = arith.constant 0 : i32
    return %arg0, %c0_i32 : i32, i32
  }
  func.func @transform_1(%arg0: i32) -> (i32, i32) {
    %c0_i32 = arith.constant 0 : i32
    %c0_i32_0 = arith.constant 0 : i32
    %c0_i32_1 = arith.constant 0 : i32
    return %c0_i32, %c0_i32_0 : i32, i32
  }
  func.func @transform_2(%arg0: i32) -> (i32, i32) {
    %c0_i32 = arith.constant 0 : i32
    %c0_i32_0 = arith.constant 0 : i32
    %c0_i32_1 = arith.constant 0 : i32
    return %c0_i32, %c0_i32_0 : i32, i32
  }
  func.func @transform_3(%arg0: i32) -> (i32, i32) {
    %c0_i32 = arith.constant 0 : i32
    %c0_i32_0 = arith.constant 0 : i32
    %c0_i32_1 = arith.constant 0 : i32
    return %c0_i32, %c0_i32_0 : i32, i32
  }
  func.func @transform_4(%arg0: i32) -> (i32, i32) {
    %c0_i32 = arith.constant 0 : i32
    %c0_i32_0 = arith.constant 0 : i32
    %c0_i32_1 = arith.constant 0 : i32
    return %c0_i32, %c0_i32_0 : i32, i32
  }
  func.func @transform_5(%arg0: i32) -> (i32, i32) {
    %c0_i32 = arith.constant 0 : i32
    %c0_i32_0 = arith.constant 0 : i32
    return %arg0, %c0_i32 : i32, i32
  }
}

</mosaic_0001>

<llo_original>
// kernel: tpu_custom_call.1
$region0: #{tpu_custom_call.1}
  #allocation0 [shape = 'u32[]', space=smem, size = 0x4, offset = 0x4, fixed_abs, tag = 'smem constant byte address 0x4 - core index']
  #allocation1 [shape = 'u32[72,128]{1,0:T(1,128)}', space=vmem, size = 0x9000, scoped, tag = 'internal scratch']
  %s0 = inlined_call_operand.hbm [shape: f32[8,128], index: 0, kind: input, shape index: {}]
  %s1 = inlined_call_operand.hbm [shape: bf16[128,128], index: 1, kind: input, shape index: {}]
  %s2 = inlined_call_operand.vmem [shape: bf16[1,128], index: 2, kind: input, shape index: {}]
  %s3 = inlined_call_operand.hbm [shape: bf16[128,128], index: 3, kind: input, shape index: {}]
  %s4 = inlined_call_operand.vmem [shape: bf16[1,128], index: 4, kind: input, shape index: {}]
  %s5 = inlined_call_operand.hbm [shape: f32[8,128], index: 5, kind: output, shape index: {}]
  %s6 = sld [smem:[#allocation0]]
  $region42: #{tpu_custom_call.1} parent=0
    _
  %s8 = ssub.s32 1, %s6
  %s9 = scalar_select 0, %s8, %s6
  $region1: #{tpu_custom_call.1} parent=0
    #allocation2 [shape = 'u8[4096]{0}', space=vmem, size = 0x1000, scoped, tag = 'input window, operand 0, single buffered']
    #allocation3 [shape = 's32[1]{0}', space=sflag, size = 0x4, scoped, tag = 'scoped memory for tpu_custom_call.1']
    #allocation4 [shape = 's32[1]{0}', space=sflag, size = 0x4, scoped, tag = 'scoped memory for tpu_custom_call.1']
    #allocation5 [shape = 'u8[32768]{0}', space=vmem, size = 0x8000, scoped, tag = 'input window, operand 1, single buffered']
    #allocation6 [shape = 's32[1]{0}', space=sflag, size = 0x4, scoped, tag = 'scoped memory for tpu_custom_call.1']
    #allocation7 [shape = 'u8[32768]{0}', space=vmem, size = 0x8000, scoped, tag = 'input window, operand 3, single buffered']
    #allocation8 [shape = 'u8[4096]{0}', space=vmem, size = 0x1000, scoped, tag = 'output window, operand 0, single buffered']
    %10 = vsyncpa [#allocation3], 0
    %11 = vsyncpa [#allocation6], 0
    %12 = vsyncpa [#allocation4], 0
    // Predicated region
    $region2: #{tpu_custom_call.1} parent=1 // pred_check
      _
    $region3: #{tpu_custom_call.1} parent=1 // pred_check_branch
      %14 = sbr.rel (0) target = $region5
    $region4: #{tpu_custom_call.1} parent=1 // pred_region
      %16 = vsyncadd [#allocation3], 0
      %s18 = sshll.u32 %s0, 4
      %s19 = int_to_ptr.hbm [resolvable:$true] %s18
      %s20 = sshll.u32 [#allocation2], 4
      %s21 = int_to_ptr.vmem [resolvable:$true] %s20
      %23 = dma.hbm_to_vmem [thread:$0]  %s19, 128, %s21, [#allocation3]
    $region5: #{tpu_custom_call.1} parent=1 // pred_fallthru
      _
    // Predicated region
    $region6: #{tpu_custom_call.1} parent=1 // pred_check
      _
    $region7: #{tpu_custom_call.1} parent=1 // pred_check_branch
      %25 = sbr.rel (0) target = $region9
    $region8: #{tpu_custom_call.1} parent=1 // pred_region
      %27 = vsyncadd [#allocation6], 0
      %s28 = sshll.u32 %s1, 4
      %s29 = int_to_ptr.hbm [resolvable:$true] %s28
      %s30 = sshll.u32 [#allocation5], 4
      %s31 = int_to_ptr.vmem [resolvable:$true] %s30
      %36 = dma.hbm_to_vmem [thread:$0]  %s29, 1024, %s31, [#allocation6], 64, 64, 4
    $region9: #{tpu_custom_call.1} parent=1 // pred_fallthru
      _
    // Predicated region
    $region10: #{tpu_custom_call.1} parent=1 // pred_check
      _
    $region11: #{tpu_custom_call.1} parent=1 // pred_check_branch
      %38 = sbr.rel (0) target = $region13
    $region12: #{tpu_custom_call.1} parent=1 // pred_region
      _
    $region13: #{tpu_custom_call.1} parent=1 // pred_fallthru
      _
    // Predicated region
    $region14: #{tpu_custom_call.1} parent=1 // pred_check
      _
    $region15: #{tpu_custom_call.1} parent=1 // pred_check_branch
      %40 = sbr.rel (0) target = $region17
    $region16: #{tpu_custom_call.1} parent=1 // pred_region
      %42 = vsyncadd [#allocation6], 0
      %s43 = sshll.u32 %s3, 4
      %s44 = int_to_ptr.hbm [resolvable:$true] %s43
      %s45 = sshll.u32 [#allocation7], 4
      %s46 = int_to_ptr.vmem [resolvable:$true] %s45
      %51 = dma.hbm_to_vmem [thread:$0]  %s44, 1024, %s46, [#allocation6], 64, 64, 4
    $region17: #{tpu_custom_call.1} parent=1 // pred_fallthru
      _
    // Predicated region
    $region18: #{tpu_custom_call.1} parent=1 // pred_check
      _
    $region19: #{tpu_custom_call.1} parent=1 // pred_check_branch
      %53 = sbr.rel (0) target = $region21
    $region20: #{tpu_custom_call.1} parent=1 // pred_region
      _
    $region21: #{tpu_custom_call.1} parent=1 // pred_fallthru
      _
    // Predicated region
    $region22: #{tpu_custom_call.1} parent=1 // pred_check
      _
    $region23: #{tpu_custom_call.1} parent=1 // pred_check_branch
      %55 = sbr.rel (0) target = $region25
    $region24: #{tpu_custom_call.1} parent=1 // pred_region
      %57 = dma.done [#allocation3], 128
    $region25: #{tpu_custom_call.1} parent=1 // pred_fallthru
      _
    // Predicated region
    $region26: #{tpu_custom_call.1} parent=1 // pred_check
      _
    $region27: #{tpu_custom_call.1} parent=1 // pred_check_branch
      %59 = sbr.rel (0) target = $region29
    $region28: #{tpu_custom_call.1} parent=1 // pred_region
      %61 = dma.done [#allocation6], 1024
    $region29: #{tpu_custom_call.1} parent=1 // pred_fallthru
      _
    // Predicated region
    $region30: #{tpu_custom_call.1} parent=1 // pred_check
      _
    $region31: #{tpu_custom_call.1} parent=1 // pred_check_branch
      %63 = sbr.rel (0) target = $region33
    $region32: #{tpu_custom_call.1} parent=1 // pred_region
      %65 = dma.done [#allocation6], 1024
    $region33: #{tpu_custom_call.1} parent=1 // pred_fallthru
      _
    %v66 = vld [vmem:[#allocation2] sm:$0xff]
    %v67 = vld [vmem:[#allocation5] sm:$0xf]
    %v68 = vld [vmem:[#allocation5 + $0x4] sm:$0xf]
    %v69 = vld [vmem:[#allocation5 + $0x8] sm:$0xf]
    %v70 = vld [vmem:[#allocation5 + $0xc] sm:$0xf]
    %v71 = vld [vmem:[#allocation5 + $0x10] sm:$0xf]
    %v72 = vld [vmem:[#allocation5 + $0x14] sm:$0xf]
    %v73 = vld [vmem:[#allocation5 + $0x18] sm:$0xf]
    %v74 = vld [vmem:[#allocation5 + $0x1c] sm:$0xf]
    %v75 = vld [vmem:[#allocation5 + $0x20] sm:$0xf]
    %v76 = vld [vmem:[#allocation5 + $0x24] sm:$0xf]
    %v77 = vld [vmem:[#allocation5 + $0x28] sm:$0xf]
    %v78 = vld [vmem:[#allocation5 + $0x2c] sm:$0xf]
    %v79 = vld [vmem:[#allocation5 + $0x30] sm:$0xf]
    %v80 = vld [vmem:[#allocation5 + $0x34] sm:$0xf]
    %v81 = vld [vmem:[#allocation5 + $0x38] sm:$0xf]
    %v82 = vld [vmem:[#allocation5 + $0x3c] sm:$0xf]
    %v83 = vld [vmem:[%s2] sm:$0x1]
    %v84 = vunpack.c.l.bf16 %v83
    %v85 = vpack.c.bf16 %v66, %v66
    %v86 = vperm.slane %v84, 0
    %v103 = vunpack.c.l.b16 %v67
    %v104 = vunpack.c.l.b16 %v68
    %v105 = vunpack.c.l.b16 %v69
    %v106 = vunpack.c.l.b16 %v70
    %v107 = vunpack.c.l.b16 %v71
    %v108 = vunpack.c.l.b16 %v72
    %v109 = vunpack.c.l.b16 %v73
    %v110 = vunpack.c.l.b16 %v74
    %v111 = vunpack.c.l.b16 %v75
    %v112 = vunpack.c.l.b16 %v76
    %v113 = vunpack.c.l.b16 %v77
    %v114 = vunpack.c.l.b16 %v78
    %v115 = vunpack.c.l.b16 %v79
    %v116 = vunpack.c.l.b16 %v80
    %v117 = vunpack.c.l.b16 %v81
    %v118 = vunpack.c.l.b16 %v82
    %v119 = vpack.c.b16 %v104, %v103
    %v120 = vpack.c.b16 %v106, %v105
    %v121 = vpack.c.b16 %v108, %v107
    %v122 = vpack.c.b16 %v110, %v109
    %v123 = vpack.c.b16 %v112, %v111
    %v124 = vpack.c.b16 %v114, %v113
    %v125 = vpack.c.b16 %v116, %v115
    %v126 = vpack.c.b16 %v118, %v117
    %135 = vmatpush.bf16.msra.mxu0 %v126
    %136 = vmatpush.bf16.msra.mxu0 %v125
    %137 = vmatpush.bf16.msra.mxu0 %v124
    %138 = vmatpush.bf16.msra.mxu0 %v123
    %139 = vmatpush.bf16.msra.mxu0 %v122
    %140 = vmatpush.bf16.msra.mxu0 %v121
    %141 = vmatpush.bf16.msra.mxu0 %v120
    %142 = vmatpush.bf16.msra.mxu0 %v119
    %143 = vmatmul.bf16.gmra.mxu0 %v85
    %v144 = vpop.f32.mrf.mxu0
    %v145 = vadd.f32 %v86, %v144
    %v146 = vpop.f32.mrf.mxu0
    %147 = vdwg.mxu0
    %v148 = vmax.f32 %v145, 0.0
    %v149 = vld [vmem:[#allocation7] sm:$0xf]
    %v150 = vld [vmem:[#allocation7 + $0x4] sm:$0xf]
    %v151 = vld [vmem:[#allocation7 + $0x8] sm:$0xf]
    %v152 = vld [vmem:[#allocation7 + $0xc] sm:$0xf]
    %v153 = vld [vmem:[#allocation7 + $0x10] sm:$0xf]
    %v154 = vld [vmem:[#allocation7 + $0x14] sm:$0xf]
    %v155 = vld [vmem:[#allocation7 + $0x18] sm:$0xf]
    %v156 = vld [vmem:[#allocation7 + $0x1c] sm:$0xf]
    %v157 = vld [vmem:[#allocation7 + $0x20] sm:$0xf]
    %v158 = vld [vmem:[#allocation7 + $0x24] sm:$0xf]
    %v159 = vld [vmem:[#allocation7 + $0x28] sm:$0xf]
    %v160 = vld [vmem:[#allocation7 + $0x2c] sm:$0xf]
    %v161 = vld [vmem:[#allocation7 + $0x30] sm:$0xf]
    %v162 = vld [vmem:[#allocation7 + $0x34] sm:$0xf]
    %v163 = vld [vmem:[#allocation7 + $0x38] sm:$0xf]
    %v164 = vld [vmem:[#allocation7 + $0x3c] sm:$0xf]
    %v165 = vld [vmem:[%s4] sm:$0x1]
    %v166 = vunpack.c.l.bf16 %v165
    %v167 = vpack.c.bf16 %v148, %v148
    %v168 = vperm.slane %v166, 0
    %v185 = vunpack.c.l.b16 %v149
    %v186 = vunpack.c.l.b16 %v150
    %v187 = vunpack.c.l.b16 %v151
    %v188 = vunpack.c.l.b16 %v152
    %v189 = vunpack.c.l.b16 %v153
    %v190 = vunpack.c.l.b16 %v154
    %v191 = vunpack.c.l.b16 %v155
    %v192 = vunpack.c.l.b16 %v156
    %v193 = vunpack.c.l.b16 %v157
    %v194 = vunpack.c.l.b16 %v158
    %v195 = vunpack.c.l.b16 %v159
    %v196 = vunpack.c.l.b16 %v160
    %v197 = vunpack.c.l.b16 %v161
    %v198 = vunpack.c.l.b16 %v162
    %v199 = vunpack.c.l.b16 %v163
    %v200 = vunpack.c.l.b16 %v164
    %v201 = vpack.c.b16 %v186, %v185
    %v202 = vpack.c.b16 %v188, %v187
    %v203 = vpack.c.b16 %v190, %v189
    %v204 = vpack.c.b16 %v192, %v191
    %v205 = vpack.c.b16 %v194, %v193
    %v206 = vpack.c.b16 %v196, %v195
    %v207 = vpack.c.b16 %v198, %v197
    %v208 = vpack.c.b16 %v200, %v199
    %217 = vmatpush.bf16.msra.mxu0 %v208
    %218 = vmatpush.bf16.msra.mxu0 %v207
    %219 = vmatpush.bf16.msra.mxu0 %v206
    %220 = vmatpush.bf16.msra.mxu0 %v205
    %221 = vmatpush.bf16.msra.mxu0 %v204
    %222 = vmatpush.bf16.msra.mxu0 %v203
    %223 = vmatpush.bf16.msra.mxu0 %v202
    %224 = vmatpush.bf16.msra.mxu0 %v201
    %225 = vmatmul.bf16.gmra.mxu0 %v167
    %v226 = vpop.f32.mrf.mxu0
    %v227 = vadd.f32 %v168, %v226
    %v228 = vpop.f32.mrf.mxu0
    %229 = vdwg.mxu0
    %v230 = vmax.f32 %v227, 0.0
    %231 = vst [vmem:[#allocation8] sm:$0xff] %v230
    // Predicated region
    $region34: #{tpu_custom_call.1} parent=1 // pred_check
      _
    $region35: #{tpu_custom_call.1} parent=1 // pred_check_branch
      %233 = sbr.rel (0) target = $region37
    $region36: #{tpu_custom_call.1} parent=1 // pred_region
      %235 = vsyncadd [#allocation4], 0
      %s237 = sshll.u32 [#allocation8], 4
      %s238 = int_to_ptr.vmem [resolvable:$true] %s237
      %s239 = sshll.u32 %s5, 4
      %s240 = int_to_ptr.hbm [resolvable:$true] %s239
      %242 = dma.vmem_to_hbm [thread:$0]  %s238, 128, %s240, [#allocation4]
    $region37: #{tpu_custom_call.1} parent=1 // pred_fallthru
      _
    // Predicated region
    $region38: #{tpu_custom_call.1} parent=1 // pred_check
      _
    $region39: #{tpu_custom_call.1} parent=1 // pred_check_branch
      %244 = sbr.rel (0) target = $region41
    $region40: #{tpu_custom_call.1} parent=1 // pred_region
      %246 = dma.done [#allocation4], 128
    $region41: #{tpu_custom_call.1} parent=1 // pred_fallthru
      _
    %247 = vsyncpa [#allocation3], 1
    %248 = vsyncpa [#allocation6], 1
    %249 = vsyncpa [#allocation4], 1

// kernel: tpu_custom_call.1
$region0: #{tpu_custom_call.1}
  #allocation0 [shape = 'u32[]', space=smem, size = 0x4, offset = 0x4, fixed_abs, tag = 'smem constant byte address 0x4 - core index']
  #allocation1 [shape = 'u32[72,128]{1,0:T(1,128)}', space=vmem, size = 0x9000, scoped, tag = 'internal scratch']
  %s0 = inlined_call_operand.hbm [shape: f32[8,128], index: 0, kind: input, shape index: {}]
  %s1 = inlined_call_operand.hbm [shape: bf16[128,128], index: 1, kind: input, shape index: {}]
  %s2 = inlined_call_operand.vmem [shape: bf16[1,128], index: 2, kind: input, shape index: {}]
  %s3 = inlined_call_operand.hbm [shape: bf16[128,128], index: 3, kind: input, shape index: {}]
  %s4 = inlined_call_operand.vmem [shape: bf16[1,128], index: 4, kind: input, shape index: {}]
  %s5 = inlined_call_operand.hbm [shape: f32[8,128], index: 5, kind: output, shape index: {}]
  %s6 = sld [smem:[#allocation0]]
  $region42: #{tpu_custom_call.1} parent=0
    _
  %s8 = ssub.s32 1, %s6
  %s9 = scalar_select 0, %s8, %s6
  $region1: #{tpu_custom_call.1} parent=0
    #allocation2 [shape = 'u8[4096]{0}', space=vmem, size = 0x1000, scoped, tag = 'input window, operand 0, single buffered']
    #allocation3 [shape = 's32[1]{0}', space=sflag, size = 0x4, scoped, tag = 'scoped memory for tpu_custom_call.1']
    #allocation4 [shape = 's32[1]{0}', space=sflag, size = 0x4, scoped, tag = 'scoped memory for tpu_custom_call.1']
    #allocation5 [shape = 'u8[32768]{0}', space=vmem, size = 0x8000, scoped, tag = 'input window, operand 1, single buffered']
    #allocation6 [shape = 's32[1]{0}', space=sflag, size = 0x4, scoped, tag = 'scoped memory for tpu_custom_call.1']
    #allocation7 [shape = 'u8[32768]{0}', space=vmem, size = 0x8000, scoped, tag = 'input window, operand 3, single buffered']
    #allocation8 [shape = 'u8[4096]{0}', space=vmem, size = 0x1000, scoped, tag = 'output window, operand 0, single buffered']
    %10 = vsyncpa [#allocation3], 0
    %11 = vsyncpa [#allocation6], 0
    %12 = vsyncpa [#allocation4], 0
    // Predicated region
    $region2: #{tpu_custom_call.1} parent=1 // pred_check
      _
    $region3: #{tpu_custom_call.1} parent=1 // pred_check_branch
      %14 = sbr.rel (0) target = $region5
    $region4: #{tpu_custom_call.1} parent=1 // pred_region
      %16 = vsyncadd [#allocation3], 0
      %s18 = sshll.u32 %s0, 4
      %s19 = int_to_ptr.hbm [resolvable:$true] %s18
      %s20 = sshll.u32 [#allocation2], 4
      %s21 = int_to_ptr.vmem [resolvable:$true] %s20
      %23 = dma.hbm_to_vmem [thread:$0]  %s19, 128, %s21, [#allocation3]
    $region5: #{tpu_custom_call.1} parent=1 // pred_fallthru
      _
    // Predicated region
    $region6: #{tpu_custom_call.1} parent=1 // pred_check
      _
    $region7: #{tpu_custom_call.1} parent=1 // pred_check_branch
      %25 = sbr.rel (0) target = $region9
    $region8: #{tpu_custom_call.1} parent=1 // pred_region
      %27 = vsyncadd [#allocation6], 0
      %s28 = sshll.u32 %s1, 4
      %s29 = int_to_ptr.hbm [resolvable:$true] %s28
      %s30 = sshll.u32 [#allocation5], 4
      %s31 = int_to_ptr.vmem [resolvable:$true] %s30
      %36 = dma.hbm_to_vmem [thread:$0]  %s29, 1024, %s31, [#allocation6], 64, 64, 4
    $region9: #{tpu_custom_call.1} parent=1 // pred_fallthru
      _
    // Predicated region
    $region10: #{tpu_custom_call.1} parent=1 // pred_check
      _
    $region11: #{tpu_custom_call.1} parent=1 // pred_check_branch
      %38 = sbr.rel (0) target = $region13
    $region12: #{tpu_custom_call.1} parent=1 // pred_region
      _
    $region13: #{tpu_custom_call.1} parent=1 // pred_fallthru
      _
    // Predicated region
    $region14: #{tpu_custom_call.1} parent=1 // pred_check
      _
    $region15: #{tpu_custom_call.1} parent=1 // pred_check_branch
      %40 = sbr.rel (0) target = $region17
    $region16: #{tpu_custom_call.1} parent=1 // pred_region
      %42 = vsyncadd [#allocation6], 0
      %s43 = sshll.u32 %s3, 4
      %s44 = int_to_ptr.hbm [resolvable:$true] %s43
      %s45 = sshll.u32 [#allocation7], 4
      %s46 = int_to_ptr.vmem [resolvable:$true] %s45
      %51 = dma.hbm_to_vmem [thread:$0]  %s44, 1024, %s46, [#allocation6], 64, 64, 4
    $region17: #{tpu_custom_call.1} parent=1 // pred_fallthru
      _
    // Predicated region
    $region18: #{tpu_custom_call.1} parent=1 // pred_check
      _
    $region19: #{tpu_custom_call.1} parent=1 // pred_check_branch
      %53 = sbr.rel (0) target = $region21
    $region20: #{tpu_custom_call.1} parent=1 // pred_region
      _
    $region21: #{tpu_custom_call.1} parent=1 // pred_fallthru
      _
    // Predicated region
    $region22: #{tpu_custom_call.1} parent=1 // pred_check
      _
    $region23: #{tpu_custom_call.1} parent=1 // pred_check_branch
      %55 = sbr.rel (0) target = $region25
    $region24: #{tpu_custom_call.1} parent=1 // pred_region
      %57 = dma.done [#allocation3], 128
    $region25: #{tpu_custom_call.1} parent=1 // pred_fallthru
      _
    // Predicated region
    $region26: #{tpu_custom_call.1} parent=1 // pred_check
      _
    $region27: #{tpu_custom_call.1} parent=1 // pred_check_branch
      %59 = sbr.rel (0) target = $region29
    $region28: #{tpu_custom_call.1} parent=1 // pred_region
      %61 = dma.done [#allocation6], 1024
    $region29: #{tpu_custom_call.1} parent=1 // pred_fallthru
      _
    // Predicated region
    $region30: #{tpu_custom_call.1} parent=1 // pred_check
      _
    $region31: #{tpu_custom_call.1} parent=1 // pred_check_branch
      %63 = sbr.rel (0) target = $region33
    $region32: #{tpu_custom_call.1} parent=1 // pred_region
      %65 = dma.done [#allocation6], 1024
    $region33: #{tpu_custom_call.1} parent=1 // pred_fallthru
      _
    %v66 = vld [vmem:[#allocation2] sm:$0xff]
    %v67 = vld [vmem:[#allocation5] sm:$0xf]
    %v68 = vld [vmem:[#allocation5 + $0x4] sm:$0xf]
    %v69 = vld [vmem:[#allocation5 + $0x8] sm:$0xf]
    %v70 = vld [vmem:[#allocation5 + $0xc] sm:$0xf]
    %v71 = vld [vmem:[#allocation5 + $0x10] sm:$0xf]
    %v72 = vld [vmem:[#allocation5 + $0x14] sm:$0xf]
    %v73 = vld [vmem:[#allocation5 + $0x18] sm:$0xf]
    %v74 = vld [vmem:[#allocation5 + $0x1c] sm:$0xf]
    %v75 = vld [vmem:[#allocation5 + $0x20] sm:$0xf]
    %v76 = vld [vmem:[#allocation5 + $0x24] sm:$0xf]
    %v77 = vld [vmem:[#allocation5 + $0x28] sm:$0xf]
    %v78 = vld [vmem:[#allocation5 + $0x2c] sm:$0xf]
    %v79 = vld [vmem:[#allocation5 + $0x30] sm:$0xf]
    %v80 = vld [vmem:[#allocation5 + $0x34] sm:$0xf]
    %v81 = vld [vmem:[#allocation5 + $0x38] sm:$0xf]
    %v82 = vld [vmem:[#allocation5 + $0x3c] sm:$0xf]
    %v83 = vld [vmem:[%s2] sm:$0x1]
    %v84 = vunpack.c.l.bf16 %v83
    %v85 = vpack.c.bf16 %v66, %v66
    %v86 = vperm.slane %v84, 0
    %v103 = vunpack.c.l.b16 %v67
    %v104 = vunpack.c.l.b16 %v68
    %v105 = vunpack.c.l.b16 %v69
    %v106 = vunpack.c.l.b16 %v70
    %v107 = vunpack.c.l.b16 %v71
    %v108 = vunpack.c.l.b16 %v72
    %v109 = vunpack.c.l.b16 %v73
    %v110 = vunpack.c.l.b16 %v74
    %v111 = vunpack.c.l.b16 %v75
    %v112 = vunpack.c.l.b16 %v76
    %v113 = vunpack.c.l.b16 %v77
    %v114 = vunpack.c.l.b16 %v78
    %v115 = vunpack.c.l.b16 %v79
    %v116 = vunpack.c.l.b16 %v80
    %v117 = vunpack.c.l.b16 %v81
    %v118 = vunpack.c.l.b16 %v82
    %v119 = vpack.c.b16 %v104, %v103
    %v120 = vpack.c.b16 %v106, %v105
    %v121 = vpack.c.b16 %v108, %v107
    %v122 = vpack.c.b16 %v110, %v109
    %v123 = vpack.c.b16 %v112, %v111
    %v124 = vpack.c.b16 %v114, %v113
    %v125 = vpack.c.b16 %v116, %v115
    %v126 = vpack.c.b16 %v118, %v117
    %135 = vmatpush.bf16.msra.mxu0 %v126
    %136 = vmatpush.bf16.msra.mxu0 %v125
    %137 = vmatpush.bf16.msra.mxu0 %v124
    %138 = vmatpush.bf16.msra.mxu0 %v123
    %139 = vmatpush.bf16.msra.mxu0 %v122
    %140 = vmatpush.bf16.msra.mxu0 %v121
    %141 = vmatpush.bf16.msra.mxu0 %v120
    %142 = vmatpush.bf16.msra.mxu0 %v119
    %143 = vmatmul.bf16.gmra.mxu0 %v85
    %v144 = vpop.f32.mrf.mxu0
    %v145 = vadd.f32 %v86, %v144
    %v146 = vpop.f32.mrf.mxu0
    %147 = vdwg.mxu0
    %v148 = vmax.f32 %v145, 0.0
    %v149 = vld [vmem:[#allocation7] sm:$0xf]
    %v150 = vld [vmem:[#allocation7 + $0x4] sm:$0xf]
    %v151 = vld [vmem:[#allocation7 + $0x8] sm:$0xf]
    %v152 = vld [vmem:[#allocation7 + $0xc] sm:$0xf]
    %v153 = vld [vmem:[#allocation7 + $0x10] sm:$0xf]
    %v154 = vld [vmem:[#allocation7 + $0x14] sm:$0xf]
    %v155 = vld [vmem:[#allocation7 + $0x18] sm:$0xf]
    %v156 = vld [vmem:[#allocation7 + $0x1c] sm:$0xf]
    %v157 = vld [vmem:[#allocation7 + $0x20] sm:$0xf]
    %v158 = vld [vmem:[#allocation7 + $0x24] sm:$0xf]
    %v159 = vld [vmem:[#allocation7 + $0x28] sm:$0xf]
    %v160 = vld [vmem:[#allocation7 + $0x2c] sm:$0xf]
    %v161 = vld [vmem:[#allocation7 + $0x30] sm:$0xf]
    %v162 = vld [vmem:[#allocation7 + $0x34] sm:$0xf]
    %v163 = vld [vmem:[#allocation7 + $0x38] sm:$0xf]
    %v164 = vld [vmem:[#allocation7 + $0x3c] sm:$0xf]
    %v165 = vld [vmem:[%s4] sm:$0x1]
    %v166 = vunpack.c.l.bf16 %v165
    %v167 = vpack.c.bf16 %v148, %v148
    %v168 = vperm.slane %v166, 0
    %v185 = vunpack.c.l.b16 %v149
    %v186 = vunpack.c.l.b16 %v150
    %v187 = vunpack.c.l.b16 %v151
    %v188 = vunpack.c.l.b16 %v152
    %v189 = vunpack.c.l.b16 %v153
    %v190 = vunpack.c.l.b16 %v154
    %v191 = vunpack.c.l.b16 %v155
    %v192 = vunpack.c.l.b16 %v156
    %v193 = vunpack.c.l.b16 %v157
    %v194 = vunpack.c.l.b16 %v158
    %v195 = vunpack.c.l.b16 %v159
    %v196 = vunpack.c.l.b16 %v160
    %v197 = vunpack.c.l.b16 %v161
    %v198 = vunpack.c.l.b16 %v162
    %v199 = vunpack.c.l.b16 %v163
    %v200 = vunpack.c.l.b16 %v164
    %v201 = vpack.c.b16 %v186, %v185
    %v202 = vpack.c.b16 %v188, %v187
    %v203 = vpack.c.b16 %v190, %v189
    %v204 = vpack.c.b16 %v192, %v191
    %v205 = vpack.c.b16 %v194, %v193
    %v206 = vpack.c.b16 %v196, %v195
    %v207 = vpack.c.b16 %v198, %v197
    %v208 = vpack.c.b16 %v200, %v199
    %217 = vmatpush.bf16.msra.mxu0 %v208
    %218 = vmatpush.bf16.msra.mxu0 %v207
    %219 = vmatpush.bf16.msra.mxu0 %v206
    %220 = vmatpush.bf16.msra.mxu0 %v205
    %221 = vmatpush.bf16.msra.mxu0 %v204
    %222 = vmatpush.bf16.msra.mxu0 %v203
    %223 = vmatpush.bf16.msra.mxu0 %v202
    %224 = vmatpush.bf16.msra.mxu0 %v201
    %225 = vmatmul.bf16.gmra.mxu0 %v167
    %v226 = vpop.f32.mrf.mxu0
    %v227 = vadd.f32 %v168, %v226
    %v228 = vpop.f32.mrf.mxu0
    %229 = vdwg.mxu0
    %v230 = vmax.f32 %v227, 0.0
    %231 = vst [vmem:[#allocation8] sm:$0xff] %v230
    // Predicated region
    $region34: #{tpu_custom_call.1} parent=1 // pred_check
      _
    $region35: #{tpu_custom_call.1} parent=1 // pred_check_branch
      %233 = sbr.rel (0) target = $region37
    $region36: #{tpu_custom_call.1} parent=1 // pred_region
      %235 = vsyncadd [#allocation4], 0
      %s237 = sshll.u32 [#allocation8], 4
      %s238 = int_to_ptr.vmem [resolvable:$true] %s237
      %s239 = sshll.u32 %s5, 4
      %s240 = int_to_ptr.hbm [resolvable:$true] %s239
      %242 = dma.vmem_to_hbm [thread:$0]  %s238, 128, %s240, [#allocation4]
    $region37: #{tpu_custom_call.1} parent=1 // pred_fallthru
      _
    // Predicated region
    $region38: #{tpu_custom_call.1} parent=1 // pred_check
      _
    $region39: #{tpu_custom_call.1} parent=1 // pred_check_branch
      %244 = sbr.rel (0) target = $region41
    $region40: #{tpu_custom_call.1} parent=1 // pred_region
      %246 = dma.done [#allocation4], 128
    $region41: #{tpu_custom_call.1} parent=1 // pred_fallthru
      _
    %247 = vsyncpa [#allocation3], 1
    %248 = vsyncpa [#allocation6], 1
    %249 = vsyncpa [#allocation4], 1

</llo_original>
